<compile_context>
chip_gen: v7x
topology: tpu7x:2x2x1
jax: 0.10.0
libtpu: 0.0.40
codegen_flags: <defaults>
</compile_context>

<pallas_src>
import functools

import jax
import jax.numpy as jnp
from jax.experimental import pallas as pl
from jax.experimental.pallas import tpu as pltpu


_LANE_CANDIDATES = (4096, 2048, 1024, 512, 256, 128)
# ~2M elements per block: 8 MiB f32 input + 2 MiB fp8 output. Double-buffered
# (in + out) that is ~20 MiB, which fits every generation once the scoped VMEM
# limit is raised to 32 MiB (v7x physical VMEM is 64 MiB per TC).
_TARGET_BLOCK_ELEMS = 2 * 1024 * 1024


def _quant_input_kernel(scale_inv_ref, x_ref, o_ref, *, clip_max):
    # y = saturating_cast_to_fp8(x * scale_inv); NaN propagates like the torch cast.
    s = scale_inv_ref[0]                                   # scalar from SMEM (prefetched)
    scaled = x_ref[...].astype(jnp.float32) * s
    clipped = jnp.clip(scaled, -clip_max, clip_max)        # saturate to fp8 range
    sat = jnp.where(jnp.isnan(scaled), scaled, clipped)    # preserve NaN
    o_ref[...] = sat.astype(o_ref.dtype)                   # RNE cast to lp_dtype


def _choose_layout(n):
    """Pick a lane width C (multiple of 128, dividing n); prefer >=8 rows."""
    for c in _LANE_CANDIDATES:
        if n % c == 0 and n // c >= 8:
            return n // c, c
    for c in _LANE_CANDIDATES:
        if n % c == 0:
            return n // c, c
    raise ValueError(f"element count {n} is not a multiple of 128")


def _quant_aligned(flat, scale_arr, lp_dtype, clip_max):
    """Quantize a flat array whose length is a multiple of 128 (no copies)."""
    n = flat.shape[0]
    R, C = _choose_layout(n)
    x2 = flat.reshape(R, C)  # contiguous, zero-copy view

    # Row block sized for ~_TARGET_BLOCK_ELEMS elements; multiple of 32 sublanes
    # (fp8 output packs 4 rows per 32-bit word), or the full extent if small.
    rows_per_block = max(1, _TARGET_BLOCK_ELEMS // C)
    if rows_per_block >= R:
        block_rows = R
    else:
        block_rows = max(32, (rows_per_block // 32) * 32)

    grid = (pl.cdiv(R, block_rows),)  # ragged last row-block handled by Pallas

    itemsize = x2.dtype.itemsize
    in_bytes = block_rows * C * itemsize
    out_bytes = block_rows * C  # fp8 = 1 byte/elem
    # Double-buffered in+out plus slack; at least 32 MiB (raises v5e's 16 MiB
    # scoped default, no-op on v6e/v7x, and well under v7x's 64 MiB physical).
    vmem_limit = int(max(2 * (in_bytes + out_bytes) + (4 << 20), 32 << 20))

    out2 = pl.pallas_call(
        functools.partial(_quant_input_kernel, clip_max=clip_max),
        out_shape=jax.ShapeDtypeStruct((R, C), lp_dtype),
        grid_spec=pltpu.PrefetchScalarGridSpec(
            num_scalar_prefetch=1,  # scale_inv -> SMEM once, before the grid
            grid=grid,
            in_specs=[pl.BlockSpec((block_rows, C), lambda i, s: (i, 0))],
            out_specs=pl.BlockSpec((block_rows, C), lambda i, s: (i, 0)),
        ),
        compiler_params=pltpu.CompilerParams(
            dimension_semantics=("parallel",),   # megacore sharding on v7x
            vmem_limit_bytes=vmem_limit,
        ),
        cost_estimate=pl.CostEstimate(
            flops=2 * n,
            transcendentals=0,
            bytes_accessed=n * (itemsize + 1),
        ),
    )(scale_arr, x2)
    return out2.reshape(-1)


def quant_input(x, scale_inv, lp_dtype=jnp.float8_e4m3fn):
    """Pallas implementation of QuantInput.forward: fp8-quantize `x`."""
    orig_shape = x.shape
    N = int(x.size)

    scale_arr = jnp.asarray(scale_inv, dtype=jnp.float32).reshape(-1)
    if scale_arr.shape[0] != 1:
        # TODO(synk): per-channel scale_inv (QuantInputPCQ variant) not implemented.
        raise ValueError("QuantInput expects a per-tensor (scalar) scale_inv")

    clip_max = float(jnp.finfo(lp_dtype).max)

    if N == 0:
        return jnp.zeros(orig_shape, dtype=lp_dtype)

    flat = x.reshape(-1)
    n_tail = N % 128
    n_main = N - n_tail

    parts = []
    if n_main:
        main = flat if n_tail == 0 else flat[:n_main]
        parts.append(_quant_aligned(main, scale_arr, lp_dtype, clip_max))
    if n_tail:
        # Rare misaligned tail (<128 elems): plain XLA ops, no Pallas padding.
        # TODO(synk): prefix slice + concat still cost one extra pass over the
        # tensor when N % 128 != 0; aligned tensors take the zero-copy path.
        t = flat[n_main:].astype(jnp.float32) * scale_arr[0]
        t_sat = jnp.where(jnp.isnan(t), t, jnp.clip(t, -clip_max, clip_max))
        parts.append(t_sat.astype(lp_dtype))

    out_flat = parts[0] if len(parts) == 1 else jnp.concatenate(parts)
    return out_flat.reshape(orig_shape)


class QuantInput:
    """JAX/Pallas equivalent of the PyTorch QuantInput module (per-tensor scale)."""

    # TODO(synk): HPU stochastic-rounding cast mode not implemented; RNE only.
    def __init__(self, scale_inv, lp_dtype, hp_dtype, *args, **kwargs):
        self.scale_inv = jnp.asarray(scale_inv, dtype=jnp.float32)
        self.lp_dtype = lp_dtype
        self.hp_dtype = hp_dtype

    def __call__(self, x):
        return quant_input(x, self.scale_inv, self.lp_dtype)

    def extra_repr(self):
        return (
            f"lp_dtype={self.lp_dtype}, hp_dtype={self.hp_dtype}, "
            f"scale_inv dtype={self.scale_inv.dtype}"
        )


if __name__ == "__main__":
    key = jax.random.PRNGKey(0)
    # NCHW activation-like input: batch=2, channels=4, spatial=16x16.
    x = jax.random.normal(key, (2, 4, 16, 16), dtype=jnp.float32) * 10.0
    scale_inv = jnp.float32(0.25)

    mod = QuantInput(scale_inv, lp_dtype=jnp.float8_e4m3fn, hp_dtype=jnp.bfloat16)
    y = jax.block_until_ready(mod(x))

    assert y.shape == x.shape
    assert y.dtype == jnp.dtype(jnp.float8_e4m3fn)

    clip_max = float(jnp.finfo(jnp.float8_e4m3fn).max)
    ref = jnp.clip(x.astype(jnp.float32) * scale_inv, -clip_max, clip_max).astype(
        jnp.float8_e4m3fn
    )
    y32 = y.astype(jnp.float32)
    r32 = ref.astype(jnp.float32)
    # fp8 e4m3 has ~2^-3 relative precision; allow one-ulp rounding slack.
    max_err = float(jnp.max(jnp.abs(y32 - r32)))
    assert bool(jnp.allclose(y32, r32, rtol=0.13, atol=0.02)), max_err
    print("KERNEL_OK")
</pallas_src>

<mosaic_0001>
module attributes {stable_mosaic.version = 11 : i64} {
  func.func @_quant_input_kernel(%arg0: i32, %arg1: memref<1xf32, #tpu.memory_space<smem>>, %arg2: memref<8x256xf32, #tpu.memory_space<vmem>>, %arg3: memref<8x256xf8E4M3FN, #tpu.memory_space<vmem>>) attributes {dimension_semantics = [#tpu.dimension_semantics<parallel>], iteration_bounds = array<i64: 1>, scalar_prefetch = 1 : i64, scratch_operands = 0 : i64, tpu.core_type = #tpu.core_type<tc>, window_params = [{transform_indices = @transform_0, window_bounds = array<i64: 8, 256>}, {transform_indices = @transform_1, window_bounds = array<i64: 8, 256>}]} {
    %c0 = arith.constant 0 : index
    %0 = memref.load %arg1[%c0] : memref<1xf32, #tpu.memory_space<smem>>
    %c0_0 = arith.constant 0 : index
    %c0_1 = arith.constant 0 : index
    %1 = vector.load %arg2[%c0_0, %c0_1] : memref<8x256xf32, #tpu.memory_space<vmem>>, vector<8x256xf32>
    %2 = vector.broadcast %0 : f32 to vector<8x256xf32>
    %3 = arith.mulf %1, %2 : vector<8x256xf32>
    %cst = arith.constant -4.480000e+02 : f32
    %cst_2 = arith.constant 4.480000e+02 : f32
    %4 = vector.broadcast %cst : f32 to vector<8x256xf32>
    %5 = arith.maximumf %4, %3 : vector<8x256xf32>
    %6 = vector.broadcast %cst_2 : f32 to vector<8x256xf32>
    %7 = arith.minimumf %6, %5 : vector<8x256xf32>
    %8 = arith.cmpf one, %3, %3 : vector<8x256xf32>
    %9 = arith.select %8, %3, %7 : vector<8x256xi1>, vector<8x256xf32>
    %10 = arith.truncf %9 : vector<8x256xf32> to vector<8x256xf8E4M3FN>
    %c0_3 = arith.constant 0 : index
    %c0_4 = arith.constant 0 : index
    %11 = vector.load %arg3[%c0_3, %c0_4] : memref<8x256xf8E4M3FN, #tpu.memory_space<vmem>>, vector<8x256xf8E4M3FN>
    tpu.vector_store %arg3[%c0_3, %c0_4], %10 {strides = array<i32>} : memref<8x256xf8E4M3FN, #tpu.memory_space<vmem>>, vector<8x256xf8E4M3FN>,
    return
  }
  func.func @transform_0(%arg0: i32, %arg1: memref<1xf32, #tpu.memory_space<smem>>) -> (i32, i32) {
    %c0_i32 = arith.constant 0 : i32
    %c0_i32_0 = arith.constant 0 : i32
    return %arg0, %c0_i32 : i32, i32
  }
  func.func @transform_1(%arg0: i32, %arg1: memref<1xf32, #tpu.memory_space<smem>>) -> (i32, i32) {
    %c0_i32 = arith.constant 0 : i32
    %c0_i32_0 = arith.constant 0 : i32
    return %arg0, %c0_i32 : i32, i32
  }
}

</mosaic_0001>

<llo_original>
// kernel: tpu_custom_call.1
$region0: #{tpu_custom_call.1}
  #allocation0 [shape = 'u32[]', space=smem, size = 0x4, offset = 0x4, fixed_abs, tag = 'smem constant byte address 0x4 - core index']
  #allocation1 [shape = 'u32[144,128]{1,0:T(1,128)}', space=vmem, size = 0x12000, scoped, tag = 'internal scratch']
  #allocation2 [shape = 's32[1]{0}', space=sflag, size = 0x4, scoped, tag = 'scoped memory for tpu_custom_call.1']
  #allocation3 [shape = 'f32[1]{0:T(128)S(6)}', space=smem, size = 0x200, scoped, tag = 'prefetched SMEM operand 0']
  %s0 = inlined_call_operand.<no memory space> [shape: f32[1], index: 0, kind: input, shape index: {}]
  %s1 = inlined_call_operand.hbm [shape: f32[8,256], index: 1, kind: input, shape index: {}]
  %s2 = inlined_call_operand.hbm [shape: f8e4m3fn[8,256], index: 2, kind: output, shape index: {}]
  %s3 = sld [smem:[#allocation0]]
  $region18: #{tpu_custom_call.1} parent=0
    _
  %s5 = ssub.s32 1, %s3
  %s6 = scalar_select 0, %s5, %s3
  %7 = sst [smem:[#allocation3]] %s0
  $region1: #{tpu_custom_call.1} parent=0
    #allocation4 [shape = 'u8[8192]{0}', space=vmem, size = 0x2000, scoped, tag = 'input window, operand 1, single buffered']
    #allocation5 [shape = 's32[1]{0}', space=sflag, size = 0x4, scoped, tag = 'scoped memory for tpu_custom_call.1']
    #allocation6 [shape = 's32[1]{0}', space=sflag, size = 0x4, scoped, tag = 'scoped memory for tpu_custom_call.1']
    #allocation7 [shape = 'u8[2048]{0}', space=vmem, size = 0x800, scoped, tag = 'output window, operand 0, single buffered']
    %8 = vsyncpa [#allocation5], 0
    %9 = vsyncpa [#allocation6], 0
    // Predicated region
    $region2: #{tpu_custom_call.1} parent=1 // pred_check
      _
    $region3: #{tpu_custom_call.1} parent=1 // pred_check_branch
      %11 = sbr.rel (0) target = $region5
    $region4: #{tpu_custom_call.1} parent=1 // pred_region
      %s13 = ssub.s32 256, 256
      %14 = vsyncadd [#allocation5], %s13
      %s16 = sshll.u32 [#allocation4], 4
      %s17 = int_to_ptr.vmem [resolvable:$true] %s16
      %19 = dma.hbm_to_vmem [thread:$0]  %s1, 256, %s17, [#allocation5]
    $region5: #{tpu_custom_call.1} parent=1 // pred_fallthru
      _
    // Predicated region
    $region6: #{tpu_custom_call.1} parent=1 // pred_check
      _
    $region7: #{tpu_custom_call.1} parent=1 // pred_check_branch
      %21 = sbr.rel (0) target = $region9
    $region8: #{tpu_custom_call.1} parent=1 // pred_region
      %22 = dma.done [#allocation5], 256
    $region9: #{tpu_custom_call.1} parent=1 // pred_fallthru
      _
    %s23 = sld [smem:[#allocation3]]
    %v24 = vld [vmem:[#allocation4] sm:$0xff]
    %v25 = vld [vmem:[#allocation4 + $0x8] sm:$0xff]
    %v26 = vstv %s23
    %v27 = vmul.f32 %v24, %v26
    %v28 = vmul.f32 %v25, %v26
    %v29 = vmax.f32 %v27, -448.0
    %v30 = vmax.f32 %v28, -448.0
    %v31 = vmin.f32 %v29, 448.0
    %v32 = vmin.f32 %v30, 448.0
    %vm33 = vcmp.ne.f32.partialorder %v27, %v27
    %vm34 = vcmp.ne.f32.partialorder %v28, %v28
    %v35 = vsel %vm33, %v27, %v31
    %v36 = vsel %vm34, %v28, %v32
    %v37 = vpack.c.f32.eXmY %v35, %v35, 61788
    %v41 = vpack.c.b8 %v37, %v37
    %v43 = vpack.c.f32.eXmY %v36, %v36, 61788
    %v47 = vpack.c.b8 %v43, %v43
    %v51 = vunpack.c.0.s8 %v41
    %v52 = vunpack.c.0.s8 %v47
    %v53 = vpack.c.b16 %v52, %v51
    %v54 = vpack.c.b8 %v53, %v53
    %56 = vst [vmem:[#allocation7] sm:$0xf] %v54
    // Predicated region
    $region10: #{tpu_custom_call.1} parent=1 // pred_check
      _
    $region11: #{tpu_custom_call.1} parent=1 // pred_check_branch
      %58 = sbr.rel (0) target = $region13
    $region12: #{tpu_custom_call.1} parent=1 // pred_region
      %s60 = ssub.s32 64, 64
      %61 = vsyncadd [#allocation6], %s60
      %s63 = sshll.u32 [#allocation7], 4
      %s64 = int_to_ptr.vmem [resolvable:$true] %s63
      %66 = dma.vmem_to_hbm [thread:$0]  %s64, 64, %s2, [#allocation6]
    $region13: #{tpu_custom_call.1} parent=1 // pred_fallthru
      _
    // Predicated region
    $region14: #{tpu_custom_call.1} parent=1 // pred_check
      _
    $region15: #{tpu_custom_call.1} parent=1 // pred_check_branch
      %68 = sbr.rel (0) target = $region17
    $region16: #{tpu_custom_call.1} parent=1 // pred_region
      %69 = dma.done [#allocation6], 64
    $region17: #{tpu_custom_call.1} parent=1 // pred_fallthru
      _
    %70 = vsyncpa [#allocation5], 1
    %71 = vsyncpa [#allocation6], 1

</llo_original>
